<compile_context>
chip_gen: v5e
topology: v5e:2x2
jax: 0.10.0
libtpu: 0.0.40
codegen_flags: <defaults>
</compile_context>

<pallas_src>
import functools

import jax
import jax.numpy as jnp
from jax import lax
from jax.experimental import pallas as pl
from jax.experimental.pallas import tpu as pltpu

_LANE = 128
_SUB = 8
_CHUNK_ROWS = 512            # rows per in-kernel slice: 512 x 128 f32 = 256 KiB
_MAX_BLOCK_BYTES = 4 << 20   # per-input, per-pipeline-buffer tile budget (4 MiB)
_EPS = 1e-8                  # PyTorch nn.CosineSimilarity default eps


def _cdiv(a, b):
    return -(-a // b)


def _round_up(a, b):
    return _cdiv(a, b) * b


def _cos_loss_kernel(x_ref, y_ref, o_ref, *, steps_per_core, block_rows,
                     chunk_rows, valid_rows, need_mask):
    c = pl.program_id(0)   # core-split axis ("parallel")
    i = pl.program_id(1)   # reduction axis ("arbitrary")

    # The output block for this core stays resident across the whole reduction
    # axis (its index_map ignores i), so it doubles as the f32 accumulator.
    @pl.when(i == 0)
    def _():
        o_ref[...] = jnp.zeros_like(o_ref)

    # Unclamped global row offset of this block (may exceed valid_rows for
    # overhanging / clamped blocks; those rows are masked out below).
    block_base = (c * steps_per_core + i) * block_rows
    if need_mask:
        row_iota = lax.broadcasted_iota(jnp.int32, (chunk_rows, _LANE), 0)

    def fold(v):
        # (chunk_rows, 128) -> (8, 128): tree of full-vreg adds on the VPU;
        # no cross-lane (XLU) reduction per step.
        return jnp.sum(v.reshape(-1, _SUB, _LANE), axis=0)

    def accum(xs, ys, row0, carry):
        sxy, sxx, syy = carry
        xs = xs.astype(jnp.float32)
        ys = ys.astype(jnp.float32)
        if need_mask:
            live = (row0 + row_iota) < valid_rows
            xs = jnp.where(live, xs, 0.0)
            ys = jnp.where(live, ys, 0.0)
        return (sxy + fold(xs * ys), sxx + fold(xs * xs), syy + fold(ys * ys))

    zero = jnp.zeros((_SUB, _LANE), jnp.float32)
    nsub = block_rows // chunk_rows
    if nsub == 1:
        sxy, sxx, syy = accum(x_ref[...], y_ref[...], block_base,
                              (zero, zero, zero))
    else:
        def body(j, carry):
            off = pl.multiple_of(j * chunk_rows, chunk_rows)
            return accum(x_ref[pl.ds(off, chunk_rows), :],
                         y_ref[pl.ds(off, chunk_rows), :],
                         block_base + off, carry)

        sxy, sxx, syy = lax.fori_loop(0, nsub, body, (zero, zero, zero))

    o_ref[0, 0] += sxy
    o_ref[0, 1] += sxx
    o_ref[0, 2] += syy


def _as_lane_slab(a, rows_pad):
    """Flatten in the original dtype; zero-pad only to the minimal sublane tile
    (NOT to a block multiple) and view as a lane-dense [rows_pad, 128] slab."""
    flat = jnp.reshape(a, (-1,))
    pad = rows_pad * _LANE - flat.shape[0]
    if pad:
        # Only fires when n is not already lane/sublane aligned; ragged block
        # tails are handled in-kernel by masking, not by padding.
        flat = jnp.concatenate([flat, jnp.zeros((pad,), flat.dtype)])
    return jnp.reshape(flat, (rows_pad, _LANE))


def cos_loss(x, y):
    """Equivalent of the PyTorch cos_loss forward. Returns shape (1,) float32."""
    assert x.size == y.size, "x and y must have the same number of elements"
    n = int(x.size)
    assert n > 0

    isx = jnp.dtype(x.dtype).itemsize
    isy = jnp.dtype(y.dtype).itemsize
    # Sublane packing multiple: 8 rows for 32-bit, 16 for bf16, 32 for int8/fp8.
    sub_mult = _SUB * max(1, 4 // isx, 4 // isy)

    rows = _cdiv(n, _LANE)
    rows_pad = _round_up(max(rows, 1), sub_mult)

    if rows_pad <= _CHUNK_ROWS:
        # Small input: single block, single core, single in-kernel slice.
        ncores, steps_per_core = 1, 1
        block_rows = rows_pad
        chunk_rows = rows_pad
    else:
        chunk_rows = _CHUNK_ROWS
        total_chunks = _cdiv(rows_pad, chunk_rows)
        max_cpb = max(1, _MAX_BLOCK_BYTES // (chunk_rows * _LANE * max(isx, isy)))
        # Split across (up to) two TensorCores, then balance block sizes so the
        # masked overhang is bounded by < chunk_rows per block.
        ncores = 2 if total_chunks >= 2 else 1
        nblocks = ncores * _cdiv(_cdiv(total_chunks, max_cpb), ncores)
        chunks_per_block = _cdiv(total_chunks, nblocks)
        block_rows = chunks_per_block * chunk_rows
        steps_per_core = nblocks // ncores

    valid_rows = rows_pad
    need_mask = (ncores * steps_per_core * block_rows) != rows_pad
    max_blk = _cdiv(rows_pad, block_rows) - 1

    def in_map(c, i):
        blk = c * steps_per_core + i
        # Clamp fully-out-of-range overhang blocks back in bounds; their rows
        # are zeroed by the in-kernel mask, so nothing is double counted.
        return (jnp.minimum(blk, max_blk), 0)

    x2d = _as_lane_slab(x, rows_pad)
    y2d = _as_lane_slab(y, rows_pad)

    kernel = functools.partial(
        _cos_loss_kernel,
        steps_per_core=steps_per_core, block_rows=block_rows,
        chunk_rows=chunk_rows, valid_rows=valid_rows, need_mask=need_mask)

    # Double-buffered input tiles + headroom for in-kernel slices; explicit so
    # v5e's 16 MiB default scoped VMEM doesn't gate us and v7x's 64 MiB
    # physical VMEM is never exceeded.
    in_bytes = 2 * block_rows * _LANE * (isx + isy)
    vmem_limit = int(min(max(in_bytes + (8 << 20), 16 << 20), 48 << 20))

    parts = pl.pallas_call(
        kernel,
        out_shape=jax.ShapeDtypeStruct((ncores, 3, _SUB, _LANE), jnp.float32),
        grid_spec=pltpu.PrefetchScalarGridSpec(
            num_scalar_prefetch=0,
            grid=(ncores, steps_per_core),
            in_specs=[
                pl.BlockSpec((block_rows, _LANE), in_map),
                pl.BlockSpec((block_rows, _LANE), in_map),
            ],
            out_specs=pl.BlockSpec((1, 3, _SUB, _LANE),
                                   lambda c, i: (c, 0, 0, 0)),
        ),
        compiler_params=pltpu.CompilerParams(
            dimension_semantics=("parallel", "arbitrary"),
            vmem_limit_bytes=vmem_limit,
        ),
    )(x2d, y2d)

    # Tiny final combine (one cross-lane reduce over 2*3*8*128 floats) in JAX.
    sums = jnp.sum(parts, axis=(0, 2, 3))            # [x.y, x.x, y.y]
    xn = jnp.maximum(jnp.sqrt(sums[1]), jnp.float32(_EPS))
    yn = jnp.maximum(jnp.sqrt(sums[2]), jnp.float32(_EPS))
    return jnp.reshape(1.0 - sums[0] / (xn * yn), (1,))


def _ref_cos_loss(x, y):
    # Pure-JAX reference (PyTorch CosineSimilarity semantics: per-norm eps clamp).
    xf = jnp.reshape(x, (-1,)).astype(jnp.float32)
    yf = jnp.reshape(y, (-1,)).astype(jnp.float32)
    dot = jnp.sum(xf * yf)
    denom = (jnp.maximum(jnp.linalg.norm(xf), _EPS)
             * jnp.maximum(jnp.linalg.norm(yf), _EPS))
    return jnp.reshape(1.0 - dot / denom, (1,))


if __name__ == "__main__":
    key = jax.random.PRNGKey(0)
    tests = [
        ((2, 4, 16, 16), jnp.float32),  # aligned single-block fast path
        ((2, 4, 96, 96), jnp.float32),  # multi-block, 2-core split, masked tail
        ((3, 5, 7), jnp.float32),       # lane-ragged (pads to minimal 8x128 tile)
    ]
    for shape, dt in tests:
        key, kx, ky = jax.random.split(key, 3)
        x = jax.random.normal(kx, shape, dtype=dt)
        y = jax.random.normal(ky, shape, dtype=dt)
        loss = jax.block_until_ready(cos_loss(x, y))
        ref = _ref_cos_loss(x, y)
        assert loss.shape == (1,)
        assert jnp.allclose(loss, ref, atol=1e-5, rtol=1e-5), (shape, loss, ref)
    print("KERNEL_OK")
</pallas_src>

<mosaic_0001>
module attributes {stable_mosaic.version = 11 : i64} {
  func.func @_cos_loss_kernel(%arg0: i32, %arg1: i32, %arg2: memref<16x128xf32, #tpu.memory_space<vmem>>, %arg3: memref<16x128xf32, #tpu.memory_space<vmem>>, %arg4: memref<1x3x8x128xf32, #tpu.memory_space<vmem>>) attributes {dimension_semantics = [#tpu.dimension_semantics<parallel>, #tpu.dimension_semantics<arbitrary>], iteration_bounds = array<i64: 1, 1>, scalar_prefetch = 0 : i64, scratch_operands = 0 : i64, tpu.core_type = #tpu.core_type<tc>, window_params = [{transform_indices = @transform_0, window_bounds = array<i64: 16, 128>}, {transform_indices = @transform_1, window_bounds = array<i64: 16, 128>}, {transform_indices = @transform_2, window_bounds = array<i64: 1, 3, 8, 128>}]} {
    %c0_i32 = arith.constant 0 : i32
    %0 = arith.cmpi eq, %arg1, %c0_i32 : i32
    %1 = arith.extui %0 : i1 to i32
    %c0_i32_0 = arith.constant 0 : i32
    %2 = arith.cmpi ne, %1, %c0_i32_0 : i32
    scf.if %2 {
      %cst_29 = arith.constant 0.000000e+00 : f32
      %36 = vector.broadcast %cst_29 : f32 to vector<1x3x8x128xf32>
      %c0_30 = arith.constant 0 : index
      %c0_31 = arith.constant 0 : index
      %c0_32 = arith.constant 0 : index
      %c0_33 = arith.constant 0 : index
      %37 = vector.load %arg4[%c0_30, %c0_31, %c0_32, %c0_33] : memref<1x3x8x128xf32, #tpu.memory_space<vmem>>, vector<1x3x8x128xf32>
      tpu.vector_store %arg4[%c0_30, %c0_31, %c0_32, %c0_33], %36 {strides = array<i32>} : memref<1x3x8x128xf32, #tpu.memory_space<vmem>>, vector<1x3x8x128xf32>,
    } else {
    }
    %cst = arith.constant 0.000000e+00 : f32
    %3 = vector.broadcast %cst : f32 to vector<8x128xf32>
    %c0 = arith.constant 0 : index
    %c0_1 = arith.constant 0 : index
    %4 = vector.load %arg2[%c0, %c0_1] : memref<16x128xf32, #tpu.memory_space<vmem>>, vector<16x128xf32>
    %c0_2 = arith.constant 0 : index
    %c0_3 = arith.constant 0 : index
    %5 = vector.load %arg3[%c0_2, %c0_3] : memref<16x128xf32, #tpu.memory_space<vmem>>, vector<16x128xf32>
    %6 = arith.mulf %4, %5 : vector<16x128xf32>
    %7 = vector.shape_cast %6 : vector<16x128xf32> to vector<2x8x128xf32>
    %cst_4 = arith.constant dense<0.000000e+00> : vector<8x128xf32>
    %8 = vector.multi_reduction <add>, %7, %cst_4 [0] : vector<2x8x128xf32> to vector<8x128xf32>
    %9 = arith.addf %3, %8 : vector<8x128xf32>
    %10 = arith.mulf %4, %4 : vector<16x128xf32>
    %11 = vector.shape_cast %10 : vector<16x128xf32> to vector<2x8x128xf32>
    %cst_5 = arith.constant dense<0.000000e+00> : vector<8x128xf32>
    %12 = vector.multi_reduction <add>, %11, %cst_5 [0] : vector<2x8x128xf32> to vector<8x128xf32>
    %13 = arith.addf %3, %12 : vector<8x128xf32>
    %14 = arith.mulf %5, %5 : vector<16x128xf32>
    %15 = vector.shape_cast %14 : vector<16x128xf32> to vector<2x8x128xf32>
    %cst_6 = arith.constant dense<0.000000e+00> : vector<8x128xf32>
    %16 = vector.multi_reduction <add>, %15, %cst_6 [0] : vector<2x8x128xf32> to vector<8x128xf32>
    %17 = arith.addf %3, %16 : vector<8x128xf32>
    %c0_7 = arith.constant 0 : index
    %c0_8 = arith.constant 0 : index
    %c0_9 = arith.constant 0 : index
    %c0_10 = arith.constant 0 : index
    %18 = vector.load %arg4[%c0_7, %c0_8, %c0_9, %c0_10] : memref<1x3x8x128xf32, #tpu.memory_space<vmem>>, vector<1x1x8x128xf32>
    %19 = vector.shape_cast %18 : vector<1x1x8x128xf32> to vector<8x128xf32>
    %20 = arith.addf %19, %9 : vector<8x128xf32>
    %c0_11 = arith.constant 0 : index
    %c0_12 = arith.constant 0 : index
    %c0_13 = arith.constant 0 : index
    %c0_14 = arith.constant 0 : index
    %21 = vector.load %arg4[%c0_11, %c0_12, %c0_13, %c0_14] : memref<1x3x8x128xf32, #tpu.memory_space<vmem>>, vector<1x1x8x128xf32>
    %22 = vector.shape_cast %21 : vector<1x1x8x128xf32> to vector<8x128xf32>
    %23 = vector.shape_cast %20 : vector<8x128xf32> to vector<1x1x8x128xf32>
    tpu.vector_store %arg4[%c0_11, %c0_12, %c0_13, %c0_14], %23 {strides = array<i32>} : memref<1x3x8x128xf32, #tpu.memory_space<vmem>>, vector<1x1x8x128xf32>,
    %c0_15 = arith.constant 0 : index
    %c1 = arith.constant 1 : index
    %c0_16 = arith.constant 0 : index
    %c0_17 = arith.constant 0 : index
    %24 = vector.load %arg4[%c0_15, %c1, %c0_16, %c0_17] : memref<1x3x8x128xf32, #tpu.memory_space<vmem>>, vector<1x1x8x128xf32>
    %25 = vector.shape_cast %24 : vector<1x1x8x128xf32> to vector<8x128xf32>
    %26 = arith.addf %25, %13 : vector<8x128xf32>
    %c0_18 = arith.constant 0 : index
    %c1_19 = arith.constant 1 : index
    %c0_20 = arith.constant 0 : index
    %c0_21 = arith.constant 0 : index
    %27 = vector.load %arg4[%c0_18, %c1_19, %c0_20, %c0_21] : memref<1x3x8x128xf32, #tpu.memory_space<vmem>>, vector<1x1x8x128xf32>
    %28 = vector.shape_cast %27 : vector<1x1x8x128xf32> to vector<8x128xf32>
    %29 = vector.shape_cast %26 : vector<8x128xf32> to vector<1x1x8x128xf32>
    tpu.vector_store %arg4[%c0_18, %c1_19, %c0_20, %c0_21], %29 {strides = array<i32>} : memref<1x3x8x128xf32, #tpu.memory_space<vmem>>, vector<1x1x8x128xf32>,
    %c0_22 = arith.constant 0 : index
    %c2 = arith.constant 2 : index
    %c0_23 = arith.constant 0 : index
    %c0_24 = arith.constant 0 : index
    %30 = vector.load %arg4[%c0_22, %c2, %c0_23, %c0_24] : memref<1x3x8x128xf32, #tpu.memory_space<vmem>>, vector<1x1x8x128xf32>
    %31 = vector.shape_cast %30 : vector<1x1x8x128xf32> to vector<8x128xf32>
    %32 = arith.addf %31, %17 : vector<8x128xf32>
    %c0_25 = arith.constant 0 : index
    %c2_26 = arith.constant 2 : index
    %c0_27 = arith.constant 0 : index
    %c0_28 = arith.constant 0 : index
    %33 = vector.load %arg4[%c0_25, %c2_26, %c0_27, %c0_28] : memref<1x3x8x128xf32, #tpu.memory_space<vmem>>, vector<1x1x8x128xf32>
    %34 = vector.shape_cast %33 : vector<1x1x8x128xf32> to vector<8x128xf32>
    %35 = vector.shape_cast %32 : vector<8x128xf32> to vector<1x1x8x128xf32>
    tpu.vector_store %arg4[%c0_25, %c2_26, %c0_27, %c0_28], %35 {strides = array<i32>} : memref<1x3x8x128xf32, #tpu.memory_space<vmem>>, vector<1x1x8x128xf32>,
    return
  }
  func.func @transform_0(%arg0: i32, %arg1: i32) -> (i32, i32) {
    %c1_i32 = arith.constant 1 : i32
    %0 = arith.muli %arg0, %c1_i32 : i32
    %1 = arith.addi %0, %arg1 : i32
    %c0_i32 = arith.constant 0 : i32
    %2 = arith.minsi %1, %c0_i32 : i32
    %c0_i32_0 = arith.constant 0 : i32
    %c0_i32_1 = arith.constant 0 : i32
    return %2, %c0_i32_0 : i32, i32
  }
  func.func @transform_1(%arg0: i32, %arg1: i32) -> (i32, i32) {
    %c1_i32 = arith.constant 1 : i32
    %0 = arith.muli %arg0, %c1_i32 : i32
    %1 = arith.addi %0, %arg1 : i32
    %c0_i32 = arith.constant 0 : i32
    %2 = arith.minsi %1, %c0_i32 : i32
    %c0_i32_0 = arith.constant 0 : i32
    %c0_i32_1 = arith.constant 0 : i32
    return %2, %c0_i32_0 : i32, i32
  }
  func.func @transform_2(%arg0: i32, %arg1: i32) -> (i32, i32, i32, i32) {
    %c0_i32 = arith.constant 0 : i32
    %c0_i32_0 = arith.constant 0 : i32
    %c0_i32_1 = arith.constant 0 : i32
    %c0_i32_2 = arith.constant 0 : i32
    return %arg0, %c0_i32, %c0_i32_0, %c0_i32_1 : i32, i32, i32, i32
  }
}

</mosaic_0001>

<llo_original>
// kernel: tpu_custom_call.1
$region0: #{tpu_custom_call.1}
  #allocation0 [shape = 'u32[]', space=smem, size = 0x4, offset = 0x4, fixed_abs, tag = 'smem constant byte address 0x4 - core index']
  #allocation1 [shape = 'u32[72,128]{1,0:T(1,128)}', space=vmem, size = 0x9000, scoped, tag = 'internal scratch']
  %s0 = inlined_call_operand.hbm [shape: f32[16,128], index: 0, kind: input, shape index: {}]
  %s1 = inlined_call_operand.hbm [shape: f32[16,128], index: 1, kind: input, shape index: {}]
  %s2 = inlined_call_operand.hbm [shape: f32[1,3,8,128], index: 2, kind: output, shape index: {}]
  %s3 = sld [smem:[#allocation0]]
  $region30: #{tpu_custom_call.1} parent=0
    _
  %s5 = ssub.s32 1, %s3
  %s6 = scalar_select 0, %s5, %s3
  $region1: #{tpu_custom_call.1} parent=0
    #allocation2 [shape = 'u8[8192]{0}', space=vmem, size = 0x2000, scoped, tag = 'input window, operand 0, single buffered']
    #allocation3 [shape = 's32[1]{0}', space=sflag, size = 0x4, scoped, tag = 'scoped memory for tpu_custom_call.1']
    #allocation4 [shape = 's32[1]{0}', space=sflag, size = 0x4, scoped, tag = 'scoped memory for tpu_custom_call.1']
    #allocation5 [shape = 'u8[8192]{0}', space=vmem, size = 0x2000, scoped, tag = 'input window, operand 1, single buffered']
    #allocation6 [shape = 's32[1]{0}', space=sflag, size = 0x4, scoped, tag = 'scoped memory for tpu_custom_call.1']
    #allocation7 [shape = 'u8[12288]{0}', space=vmem, size = 0x3000, scoped, tag = 'output window, operand 0, single buffered']
    %7 = vsyncpa [#allocation3], 0
    %8 = vsyncpa [#allocation6], 0
    %9 = vsyncpa [#allocation4], 0
    // Predicated region
    $region2: #{tpu_custom_call.1} parent=1 // pred_check
      _
    $region3: #{tpu_custom_call.1} parent=1 // pred_check_branch
      %11 = sbr.rel (0) target = $region5
    $region4: #{tpu_custom_call.1} parent=1 // pred_region
      %s12 = sadd.s32 0, 0
      %p13 = scmp.lt.s32.totalorder %s12, 0
      %s14 = scalar_select %p13, %s12, 0
      %s15 = smul.u32 2, %s14
      %17 = vsyncadd [#allocation3], 0
      %s18 = smul.addr %s15, 8
      %s19 = scalar_lea.hbm %s0, %s18
      %s20 = sshll.u32 %s19, 4
      %s21 = int_to_ptr.hbm [resolvable:$true] %s20
      %s22 = sshll.u32 [#allocation2], 4
      %s23 = int_to_ptr.vmem [resolvable:$true] %s22
      %28 = dma.hbm_to_vmem [thread:$0]  %s21, 256, %s23, [#allocation3], 128, 128, 8
    $region5: #{tpu_custom_call.1} parent=1 // pred_fallthru
      _
    // Predicated region
    $region6: #{tpu_custom_call.1} parent=1 // pred_check
      _
    $region7: #{tpu_custom_call.1} parent=1 // pred_check_branch
      %30 = sbr.rel (0) target = $region9
    $region8: #{tpu_custom_call.1} parent=1 // pred_region
      %s31 = sadd.s32 0, 0
      %p32 = scmp.lt.s32.totalorder %s31, 0
      %s33 = scalar_select %p32, %s31, 0
      %s34 = smul.u32 2, %s33
      %36 = vsyncadd [#allocation6], 0
      %s37 = smul.addr %s34, 8
      %s38 = scalar_lea.hbm %s1, %s37
      %s39 = sshll.u32 %s38, 4
      %s40 = int_to_ptr.hbm [resolvable:$true] %s39
      %s41 = sshll.u32 [#allocation5], 4
      %s42 = int_to_ptr.vmem [resolvable:$true] %s41
      %47 = dma.hbm_to_vmem [thread:$0]  %s40, 256, %s42, [#allocation6], 128, 128, 8
    $region9: #{tpu_custom_call.1} parent=1 // pred_fallthru
      _
    // Predicated region
    $region10: #{tpu_custom_call.1} parent=1 // pred_check
      _
    $region11: #{tpu_custom_call.1} parent=1 // pred_check_branch
      %49 = sbr.rel (0) target = $region13
    $region12: #{tpu_custom_call.1} parent=1 // pred_region
      %51 = dma.done [#allocation3], 256
    $region13: #{tpu_custom_call.1} parent=1 // pred_fallthru
      _
    // Predicated region
    $region14: #{tpu_custom_call.1} parent=1 // pred_check
      _
    $region15: #{tpu_custom_call.1} parent=1 // pred_check_branch
      %53 = sbr.rel (0) target = $region17
    $region16: #{tpu_custom_call.1} parent=1 // pred_region
      %55 = dma.done [#allocation6], 256
    $region17: #{tpu_custom_call.1} parent=1 // pred_fallthru
      _
    %s56 = sadd.s32 0, 0
    %p57 = scmp.lt.s32.totalorder %s56, 0
    %s58 = scalar_select %p57, %s56, 0
    %s59 = smul.u32 2, %s58
    %s60 = sadd.s32 0, 0
    %p61 = scmp.lt.s32.totalorder %s60, 0
    %s62 = scalar_select %p61, %s60, 0
    %s63 = smul.u32 2, %s62
    %p64 = scmp.eq.s32.totalorder 0, 0
    // Predicated region
    $region18: #{tpu_custom_call.1} parent=1 // pred_check
      %p65 = pneg %p64
    $region19: #{tpu_custom_call.1} parent=1 // pred_check_branch
      %67 = sbr.rel (%p65) target = $region21
    $region20: #{tpu_custom_call.1} parent=1 // pred_region
      %68 = vst [vmem:[#allocation7] sm:$0xff] 0.0
      %69 = vst [vmem:[#allocation7 + $0x8] sm:$0xff] 0.0
      %70 = vst [vmem:[#allocation7 + $0x10] sm:$0xff] 0.0
    $region21: #{tpu_custom_call.1} parent=1 // pred_fallthru
      _
    %v71 = vld [vmem:[#allocation2] sm:$0xff]
    %v72 = vld [vmem:[#allocation2 + $0x8] sm:$0xff]
    %v73 = vld [vmem:[#allocation5] sm:$0xff]
    %v74 = vld [vmem:[#allocation5 + $0x8] sm:$0xff]
    %v75 = vmul.f32 %v71, %v73
    %v76 = vmul.f32 %v72, %v74
    %v77 = vadd.f32 %v75, %v76
    %v78 = vadd.f32 %v77, 0.0
    %v79 = vmul.f32 %v71, %v71
    %v80 = vmul.f32 %v72, %v72
    %v81 = vadd.f32 %v79, %v80
    %v82 = vadd.f32 %v81, 0.0
    %v83 = vmul.f32 %v73, %v73
    %v84 = vmul.f32 %v74, %v74
    %v85 = vadd.f32 %v83, %v84
    %v86 = vadd.f32 %v85, 0.0
    %v87 = vld [vmem:[#allocation7] sm:$0xff]
    %v88 = vadd.f32 %v87, %v78
    %89 = vst [vmem:[#allocation7] sm:$0xff] %v88
    %s90 = scalar_lea.vmem [#allocation7], 8
    %v91 = vld [vmem:[%s90] sm:$0xff]
    %v92 = vadd.f32 %v91, %v82
    %93 = vst [vmem:[%s90] sm:$0xff] %v92
    %s94 = scalar_lea.vmem [#allocation7], 16
    %v95 = vld [vmem:[%s94] sm:$0xff]
    %v96 = vadd.f32 %v95, %v86
    %97 = vst [vmem:[%s94] sm:$0xff] %v96
    // Predicated region
    $region22: #{tpu_custom_call.1} parent=1 // pred_check
      _
    $region23: #{tpu_custom_call.1} parent=1 // pred_check_branch
      %99 = sbr.rel (0) target = $region25
    $region24: #{tpu_custom_call.1} parent=1 // pred_region
      %101 = vsyncadd [#allocation4], 0
      %s102 = sshll.u32 [#allocation7], 4
      %s103 = int_to_ptr.vmem [resolvable:$true] %s102
      %s104 = sshll.u32 %s2, 4
      %s105 = int_to_ptr.hbm [resolvable:$true] %s104
      %110 = dma.vmem_to_hbm [thread:$0]  %s103, 384, %s105, [#allocation4], 128, 128, 8
    $region25: #{tpu_custom_call.1} parent=1 // pred_fallthru
      _
    // Predicated region
    $region26: #{tpu_custom_call.1} parent=1 // pred_check
      _
    $region27: #{tpu_custom_call.1} parent=1 // pred_check_branch
      %112 = sbr.rel (0) target = $region29
    $region28: #{tpu_custom_call.1} parent=1 // pred_region
      %114 = dma.done [#allocation4], 384
    $region29: #{tpu_custom_call.1} parent=1 // pred_fallthru
      _
    %115 = vsyncpa [#allocation3], 1
    %116 = vsyncpa [#allocation6], 1
    %117 = vsyncpa [#allocation4], 1

</llo_original>
